<compile_context>
chip_gen: v5e
topology: v5e:2x2
jax: 0.10.0
libtpu: 0.0.40
codegen_flags: <defaults>
</compile_context>

<pallas_src>
import functools

import jax
import jax.numpy as jnp
from jax.experimental import pallas as pl
from jax.experimental.pallas import tpu as pltpu

HIDDEN = 32
N_HEADS = 3


def _round_up(n, m):
    return ((n + m - 1) // m) * m


def _cdiv(n, m):
    return (n + m - 1) // m


def quantile_kernel(x_ref, w1_ref, b1_ref, w2_ref, b2_ref, wo_ref, bo_ref, o_ref,
                    *, act_dtype):
    # x_ref: (1, T)      w1_ref/b1_ref: (H, 1)
    # w2_ref: (H, H)     b2_ref: (H, 1)
    # wo_ref: (3, H)     bo_ref: (3, 1)     o_ref: (3, T)
    x = x_ref[...]                                                   # (1, T)

    # fc1: K=1 -> VPU broadcast multiply (outer product), skip the MXU.
    # (Implicit sublane broadcast of x; under the EUP-bound regime this is
    #  free filler either way.)
    h = jnp.tanh((w1_ref[...] * x + b1_ref[...]).astype(act_dtype))  # (H, T)

    # fc2: lane-dense 32x32 MXU matmul, f32 accumulation.
    h = jnp.tanh(
        (jnp.dot(w2_ref[...].astype(act_dtype), h,
                 preferred_element_type=jnp.float32)
         + b2_ref[...]).astype(act_dtype)
    )                                                                # (H, T)

    # Three heads packed as rows of wo -> (3, T); bias broadcasts over lanes.
    o_ref[...] = (
        jnp.dot(wo_ref[...].astype(act_dtype), h,
                preferred_element_type=jnp.float32)
        + bo_ref[...]
    ).astype(o_ref.dtype)


def quantile_forward(x, params, *, tile_n=8192, act_dtype=jnp.float32,
                     batch_on_lanes_out=False):
    """x: (N, 1) float32 -> (N, 3) float32  [low, median, high].

    batch_on_lanes_out=True returns the (3, N) layout directly and skips the
    final wrapper transpose (use it when the consumer can take that layout).
    """
    w1, b1, w2, b2, wo, bo = params
    N = int(x.shape[0])

    # Lane tile: multiple of 128, no larger than needed for one pass.
    tile = _round_up(min(int(tile_n), max(N, 1)), 128)
    # Megacore: keep at least 2 grid steps when there is enough work so the
    # "parallel" axis can shard across both TensorCores (v7x).
    if _round_up(N, 128) >= 2 * 128:
        tile = min(tile, _round_up(_cdiv(N, 2), 128))

    grid = (_cdiv(N, tile),)

    # Batch-on-lanes view: (N, 1) -> (1, N) is a free reshape (same layout).
    x_t = x.astype(jnp.float32).reshape(1, N)

    weight_spec = lambda shape: pl.BlockSpec(shape, lambda i: (0, 0))

    per_sample_flops = 2 * HIDDEN + 2 * HIDDEN * HIDDEN + 2 * HIDDEN * N_HEADS
    weight_bytes = 4 * (w1.size + b1.size + w2.size + b2.size + wo.size + bo.size)
    cost = pl.CostEstimate(
        flops=per_sample_flops * N,
        transcendentals=2 * HIDDEN * N,
        bytes_accessed=4 * (1 + N_HEADS) * N + weight_bytes,
    )

    out_t = pl.pallas_call(
        functools.partial(quantile_kernel, act_dtype=act_dtype),
        out_shape=jax.ShapeDtypeStruct((N_HEADS, N), jnp.float32),
        grid=grid,
        in_specs=[
            pl.BlockSpec((1, tile), lambda i: (0, i)),   # x, tiled over batch
            weight_spec(w1.shape),                       # resident weights
            weight_spec(b1.shape),
            weight_spec(w2.shape),
            weight_spec(b2.shape),
            weight_spec(wo.shape),
            weight_spec(bo.shape),
        ],
        out_specs=pl.BlockSpec((N_HEADS, tile), lambda i: (0, i)),
        compiler_params=pltpu.CompilerParams(
            dimension_semantics=("parallel",),
        ),
        cost_estimate=cost,
    )(x_t, w1, b1, w2, b2, wo, bo)                       # (3, N)

    if batch_on_lanes_out:
        return out_t
    # PyTorch layout; accepted wrapper transpose (kernel stores stay lane-dense).
    return out_t.T                                       # (N, 3)


def init_params(key):
    """Deterministic synthetic parameters matching the PyTorch module's shapes.

    Stored in the kernel's transposed layout (see header).  Init mimics
    PyTorch's U(-1/sqrt(fan_in), 1/sqrt(fan_in)).
    """
    ks = jax.random.split(key, 10)

    def uniform(k, shape, fan_in):
        bound = 1.0 / jnp.sqrt(fan_in)
        return jax.random.uniform(k, shape, jnp.float32, -bound, bound)

    w1 = uniform(ks[0], (HIDDEN, 1), 1.0)                  # fc1.weight (out, in)
    b1 = uniform(ks[1], (HIDDEN, 1), 1.0)                  # fc1.bias
    w2 = uniform(ks[2], (HIDDEN, HIDDEN), float(HIDDEN))   # fc2.weight (out, in)
    b2 = uniform(ks[3], (HIDDEN, 1), float(HIDDEN))        # fc2.bias
    # Three heads (low, median, high), each Linear(32, 1); packed as rows.
    w_low = uniform(ks[4], (1, HIDDEN), float(HIDDEN))
    b_low = uniform(ks[5], (1, 1), float(HIDDEN))
    w_med = uniform(ks[6], (1, HIDDEN), float(HIDDEN))
    b_med = uniform(ks[7], (1, 1), float(HIDDEN))
    w_high = uniform(ks[8], (1, HIDDEN), float(HIDDEN))
    b_high = uniform(ks[9], (1, 1), float(HIDDEN))
    wo = jnp.concatenate([w_low, w_med, w_high], axis=0)   # (3, HIDDEN)
    bo = jnp.concatenate([b_low, b_med, b_high], axis=0)   # (3, 1)
    return (w1, b1, w2, b2, wo, bo)


def reference_forward(x, params):
    """Pure-JAX reference in the PyTorch (batch-on-rows) layout."""
    w1, b1, w2, b2, wo, bo = params
    h = jnp.tanh(x @ w1.T + b1.T)        # (N, H)
    h = jnp.tanh(h @ w2.T + b2.T)        # (N, H)
    return h @ wo.T + bo.T               # (N, 3)


if __name__ == "__main__":
    key = jax.random.PRNGKey(0)
    k_x, k_p = jax.random.split(key)
    params = init_params(k_p)

    # N=8: single partial tile (masked).  N=300: 2 grid steps (megacore cap)
    # with a masked partial tail block.
    for N in (8, 300):
        x = jax.random.normal(jax.random.fold_in(k_x, N), (N, 1),
                              dtype=jnp.float32)
        out = jax.block_until_ready(quantile_forward(x, params))
        ref = reference_forward(x, params)
        assert out.shape == (N, N_HEADS)
        assert jnp.allclose(out, ref, atol=1e-5, rtol=1e-5)

        # Batch-on-lanes output path (no wrapper transpose).
        out_t = jax.block_until_ready(
            quantile_forward(x, params, batch_on_lanes_out=True))
        assert out_t.shape == (N_HEADS, N)
        assert jnp.allclose(out_t.T, ref, atol=1e-5, rtol=1e-5)

    print("KERNEL_OK")
</pallas_src>

<mosaic_0001>
module attributes {stable_mosaic.version = 11 : i64} {
  func.func @quantile_kernel(%arg0: i32, %arg1: memref<1x128xf32, #tpu.memory_space<vmem>>, %arg2: memref<32x1xf32, #tpu.memory_space<vmem>>, %arg3: memref<32x1xf32, #tpu.memory_space<vmem>>, %arg4: memref<32x32xf32, #tpu.memory_space<vmem>>, %arg5: memref<32x1xf32, #tpu.memory_space<vmem>>, %arg6: memref<3x32xf32, #tpu.memory_space<vmem>>, %arg7: memref<3x1xf32, #tpu.memory_space<vmem>>, %arg8: memref<3x128xf32, #tpu.memory_space<vmem>>) attributes {dimension_semantics = [#tpu.dimension_semantics<parallel>], iteration_bounds = array<i64: 1>, scalar_prefetch = 0 : i64, scratch_operands = 0 : i64, tpu.core_type = #tpu.core_type<tc>, window_params = [{transform_indices = @transform_0, window_bounds = array<i64: 1, 128>}, {pipeline_mode = #tpu.pipeline_mode<synchronous>, transform_indices = @transform_1, window_bounds = array<i64: 32, 1>}, {pipeline_mode = #tpu.pipeline_mode<synchronous>, transform_indices = @transform_2, window_bounds = array<i64: 32, 1>}, {pipeline_mode = #tpu.pipeline_mode<synchronous>, transform_indices = @transform_3, window_bounds = array<i64: 32, 32>}, {pipeline_mode = #tpu.pipeline_mode<synchronous>, transform_indices = @transform_4, window_bounds = array<i64: 32, 1>}, {pipeline_mode = #tpu.pipeline_mode<synchronous>, transform_indices = @transform_5, window_bounds = array<i64: 3, 32>}, {pipeline_mode = #tpu.pipeline_mode<synchronous>, transform_indices = @transform_6, window_bounds = array<i64: 3, 1>}, {transform_indices = @transform_7, window_bounds = array<i64: 3, 128>}]} {
    %c0 = arith.constant 0 : index
    %c0_0 = arith.constant 0 : index
    %0 = vector.load %arg1[%c0, %c0_0] : memref<1x128xf32, #tpu.memory_space<vmem>>, vector<1x128xf32>
    %c0_1 = arith.constant 0 : index
    %c0_2 = arith.constant 0 : index
    %1 = vector.load %arg2[%c0_1, %c0_2] : memref<32x1xf32, #tpu.memory_space<vmem>>, vector<32x1xf32>
    %2 = vector.broadcast %1 : vector<32x1xf32> to vector<32x128xf32>
    %3 = vector.broadcast %0 : vector<1x128xf32> to vector<32x128xf32>
    %4 = arith.mulf %2, %3 : vector<32x128xf32>
    %c0_3 = arith.constant 0 : index
    %c0_4 = arith.constant 0 : index
    %5 = vector.load %arg3[%c0_3, %c0_4] : memref<32x1xf32, #tpu.memory_space<vmem>>, vector<32x1xf32>
    %6 = vector.broadcast %5 : vector<32x1xf32> to vector<32x128xf32>
    %7 = arith.addf %4, %6 : vector<32x128xf32>
    %8 = math.tanh %7 : vector<32x128xf32>
    %c0_5 = arith.constant 0 : index
    %c0_6 = arith.constant 0 : index
    %9 = vector.load %arg4[%c0_5, %c0_6] : memref<32x32xf32, #tpu.memory_space<vmem>>, vector<32x32xf32>
    %cst = arith.constant dense<0.000000e+00> : vector<32x128xf32>
    %10 = tpu.matmul %9, %8, %cst {dimension_numbers = #tpu.dot_dimension_numbers<[1], [0], [0], [1], [0, 0, 1, 1], [], []>} : vector<32x32xf32>, vector<32x128xf32>, vector<32x128xf32> -> vector<32x128xf32>
    %c0_7 = arith.constant 0 : index
    %c0_8 = arith.constant 0 : index
    %11 = vector.load %arg5[%c0_7, %c0_8] : memref<32x1xf32, #tpu.memory_space<vmem>>, vector<32x1xf32>
    %12 = vector.broadcast %11 : vector<32x1xf32> to vector<32x128xf32>
    %13 = arith.addf %10, %12 : vector<32x128xf32>
    %14 = math.tanh %13 : vector<32x128xf32>
    %c0_9 = arith.constant 0 : index
    %c0_10 = arith.constant 0 : index
    %15 = vector.load %arg6[%c0_9, %c0_10] : memref<3x32xf32, #tpu.memory_space<vmem>>, vector<3x32xf32>
    %cst_11 = arith.constant dense<0.000000e+00> : vector<3x128xf32>
    %16 = tpu.matmul %15, %14, %cst_11 {dimension_numbers = #tpu.dot_dimension_numbers<[1], [0], [0], [1], [0, 0, 1, 1], [], []>} : vector<3x32xf32>, vector<32x128xf32>, vector<3x128xf32> -> vector<3x128xf32>
    %c0_12 = arith.constant 0 : index
    %c0_13 = arith.constant 0 : index
    %17 = vector.load %arg7[%c0_12, %c0_13] : memref<3x1xf32, #tpu.memory_space<vmem>>, vector<3x1xf32>
    %18 = vector.broadcast %17 : vector<3x1xf32> to vector<3x128xf32>
    %19 = arith.addf %16, %18 : vector<3x128xf32>
    %c0_14 = arith.constant 0 : index
    %c0_15 = arith.constant 0 : index
    %20 = vector.load %arg8[%c0_14, %c0_15] : memref<3x128xf32, #tpu.memory_space<vmem>>, vector<3x128xf32>
    tpu.vector_store %arg8[%c0_14, %c0_15], %19 {strides = array<i32>} : memref<3x128xf32, #tpu.memory_space<vmem>>, vector<3x128xf32>,
    return
  }
  func.func @transform_0(%arg0: i32) -> (i32, i32) {
    %c0_i32 = arith.constant 0 : i32
    %c0_i32_0 = arith.constant 0 : i32
    return %c0_i32, %arg0 : i32, i32
  }
  func.func @transform_1(%arg0: i32) -> (i32, i32) {
    %c0_i32 = arith.constant 0 : i32
    %c0_i32_0 = arith.constant 0 : i32
    %c0_i32_1 = arith.constant 0 : i32
    return %c0_i32, %c0_i32_0 : i32, i32
  }
  func.func @transform_2(%arg0: i32) -> (i32, i32) {
    %c0_i32 = arith.constant 0 : i32
    %c0_i32_0 = arith.constant 0 : i32
    %c0_i32_1 = arith.constant 0 : i32
    return %c0_i32, %c0_i32_0 : i32, i32
  }
  func.func @transform_3(%arg0: i32) -> (i32, i32) {
    %c0_i32 = arith.constant 0 : i32
    %c0_i32_0 = arith.constant 0 : i32
    %c0_i32_1 = arith.constant 0 : i32
    return %c0_i32, %c0_i32_0 : i32, i32
  }
  func.func @transform_4(%arg0: i32) -> (i32, i32) {
    %c0_i32 = arith.constant 0 : i32
    %c0_i32_0 = arith.constant 0 : i32
    %c0_i32_1 = arith.constant 0 : i32
    return %c0_i32, %c0_i32_0 : i32, i32
  }
  func.func @transform_5(%arg0: i32) -> (i32, i32) {
    %c0_i32 = arith.constant 0 : i32
    %c0_i32_0 = arith.constant 0 : i32
    %c0_i32_1 = arith.constant 0 : i32
    return %c0_i32, %c0_i32_0 : i32, i32
  }
  func.func @transform_6(%arg0: i32) -> (i32, i32) {
    %c0_i32 = arith.constant 0 : i32
    %c0_i32_0 = arith.constant 0 : i32
    %c0_i32_1 = arith.constant 0 : i32
    return %c0_i32, %c0_i32_0 : i32, i32
  }
  func.func @transform_7(%arg0: i32) -> (i32, i32) {
    %c0_i32 = arith.constant 0 : i32
    %c0_i32_0 = arith.constant 0 : i32
    return %c0_i32, %arg0 : i32, i32
  }
}

</mosaic_0001>

<llo_original>
// kernel: tpu_custom_call.1
$region0: #{tpu_custom_call.1}
  #allocation0 [shape = 'u32[]', space=smem, size = 0x4, offset = 0x4, fixed_abs, tag = 'smem constant byte address 0x4 - core index']
  #allocation1 [shape = 'u32[72,128]{1,0:T(1,128)}', space=vmem, size = 0x9000, scoped, tag = 'internal scratch']
  %s0 = inlined_call_operand.vmem [shape: f32[1,8], index: 0, kind: input, shape index: {}]
  %s1 = inlined_call_operand.vmem [shape: f32[32,1], index: 1, kind: input, shape index: {}]
  %s2 = inlined_call_operand.vmem [shape: f32[32,1], index: 2, kind: input, shape index: {}]
  %s3 = inlined_call_operand.vmem [shape: f32[32,32], index: 3, kind: input, shape index: {}]
  %s4 = inlined_call_operand.vmem [shape: f32[32,1], index: 4, kind: input, shape index: {}]
  %s5 = inlined_call_operand.vmem [shape: f32[3,32], index: 5, kind: input, shape index: {}]
  %s6 = inlined_call_operand.vmem [shape: f32[3,1], index: 6, kind: input, shape index: {}]
  %s7 = inlined_call_operand.hbm [shape: f32[3,8], index: 7, kind: output, shape index: {}]
  %s8 = sld [smem:[#allocation0]]
  $region38: #{tpu_custom_call.1} parent=0
    _
  %s10 = ssub.s32 1, %s8
  %s11 = scalar_select 0, %s10, %s8
  $region1: #{tpu_custom_call.1} parent=0
    #allocation2 [shape = 'u8[2048]{0}', space=vmem, size = 0x800, scoped, tag = 'output window, operand 0, single buffered']
    #allocation3 [shape = 's32[1]{0}', space=sflag, size = 0x4, scoped, tag = 'scoped memory for tpu_custom_call.1']
    %12 = vsyncpa [#allocation3], 0
    // Predicated region
    $region2: #{tpu_custom_call.1} parent=1 // pred_check
      _
    $region3: #{tpu_custom_call.1} parent=1 // pred_check_branch
      %14 = sbr.rel (0) target = $region5
    $region4: #{tpu_custom_call.1} parent=1 // pred_region
      _
    $region5: #{tpu_custom_call.1} parent=1 // pred_fallthru
      _
    // Predicated region
    $region6: #{tpu_custom_call.1} parent=1 // pred_check
      _
    $region7: #{tpu_custom_call.1} parent=1 // pred_check_branch
      %16 = sbr.rel (0) target = $region9
    $region8: #{tpu_custom_call.1} parent=1 // pred_region
      _
    $region9: #{tpu_custom_call.1} parent=1 // pred_fallthru
      _
    // Predicated region
    $region10: #{tpu_custom_call.1} parent=1 // pred_check
      _
    $region11: #{tpu_custom_call.1} parent=1 // pred_check_branch
      %18 = sbr.rel (0) target = $region13
    $region12: #{tpu_custom_call.1} parent=1 // pred_region
      _
    $region13: #{tpu_custom_call.1} parent=1 // pred_fallthru
      _
    // Predicated region
    $region14: #{tpu_custom_call.1} parent=1 // pred_check
      _
    $region15: #{tpu_custom_call.1} parent=1 // pred_check_branch
      %20 = sbr.rel (0) target = $region17
    $region16: #{tpu_custom_call.1} parent=1 // pred_region
      _
    $region17: #{tpu_custom_call.1} parent=1 // pred_fallthru
      _
    // Predicated region
    $region18: #{tpu_custom_call.1} parent=1 // pred_check
      _
    $region19: #{tpu_custom_call.1} parent=1 // pred_check_branch
      %22 = sbr.rel (0) target = $region21
    $region20: #{tpu_custom_call.1} parent=1 // pred_region
      _
    $region21: #{tpu_custom_call.1} parent=1 // pred_fallthru
      _
    // Predicated region
    $region22: #{tpu_custom_call.1} parent=1 // pred_check
      _
    $region23: #{tpu_custom_call.1} parent=1 // pred_check_branch
      %24 = sbr.rel (0) target = $region25
    $region24: #{tpu_custom_call.1} parent=1 // pred_region
      _
    $region25: #{tpu_custom_call.1} parent=1 // pred_fallthru
      _
    // Predicated region
    $region26: #{tpu_custom_call.1} parent=1 // pred_check
      _
    $region27: #{tpu_custom_call.1} parent=1 // pred_check_branch
      %26 = sbr.rel (0) target = $region29
    $region28: #{tpu_custom_call.1} parent=1 // pred_region
      _
    $region29: #{tpu_custom_call.1} parent=1 // pred_fallthru
      _
    %v27 = vld [vmem:[%s0] sm:$0x1]
    %v28 = vld [vmem:[%s1] sm:$0xff]
    %v29 = vld [vmem:[%s1 + $0x8] sm:$0xff]
    %v30 = vld [vmem:[%s1 + $0x10] sm:$0xff]
    %v31 = vld [vmem:[%s1 + $0x18] sm:$0xff]
    %33 = vset.pattern.permute.xlu0 0
    %34 = vperm.xlu0 %33, %v28
    %v35 = vpop.permute.xlu0 %34
    %38 = vset.pattern.permute.xlu0 0
    %39 = vperm.xlu0 %38, %v29
    %v40 = vpop.permute.xlu0 %39
    %43 = vset.pattern.permute.xlu0 0
    %44 = vperm.xlu0 %43, %v30
    %v45 = vpop.permute.xlu0 %44
    %48 = vset.pattern.permute.xlu0 0
    %49 = vperm.xlu0 %48, %v31
    %v50 = vpop.permute.xlu0 %49
    %v53 = vperm.slane %v27, 0
    %v55 = vmul.f32 %v35, %v53
    %v56 = vmul.f32 %v40, %v53
    %v57 = vmul.f32 %v45, %v53
    %v58 = vmul.f32 %v50, %v53
    %v59 = vld [vmem:[%s2] sm:$0xff]
    %v60 = vld [vmem:[%s2 + $0x8] sm:$0xff]
    %v61 = vld [vmem:[%s2 + $0x10] sm:$0xff]
    %v62 = vld [vmem:[%s2 + $0x18] sm:$0xff]
    %64 = vset.pattern.permute.xlu0 0
    %65 = vperm.xlu0 %64, %v59
    %v66 = vpop.permute.xlu0 %65
    %69 = vset.pattern.permute.xlu0 0
    %70 = vperm.xlu0 %69, %v60
    %v71 = vpop.permute.xlu0 %70
    %74 = vset.pattern.permute.xlu0 0
    %75 = vperm.xlu0 %74, %v61
    %v76 = vpop.permute.xlu0 %75
    %79 = vset.pattern.permute.xlu0 0
    %80 = vperm.xlu0 %79, %v62
    %v81 = vpop.permute.xlu0 %80
    %v83 = vadd.f32 %v55, %v66
    %v84 = vadd.f32 %v56, %v71
    %v85 = vadd.f32 %v57, %v76
    %v86 = vadd.f32 %v58, %v81
    %v87 = vtanh.pop %v83
    %v88 = vtanh.pop %v84
    %v89 = vtanh.pop %v85
    %v90 = vtanh.pop %v86
    %v91 = vld [vmem:[%s3] sm:$0xff]
    %v92 = vld [vmem:[%s3 + $0x8] sm:$0xff]
    %v93 = vld [vmem:[%s3 + $0x10] sm:$0xff]
    %v94 = vld [vmem:[%s3 + $0x18] sm:$0xff]
    %v95 = vld [vmem:[%s4] sm:$0xff]
    %v96 = vld [vmem:[%s4 + $0x8] sm:$0xff]
    %v97 = vld [vmem:[%s4 + $0x10] sm:$0xff]
    %v98 = vld [vmem:[%s4 + $0x18] sm:$0xff]
    %100 = vset.pattern.permute.xlu0 0
    %101 = vperm.xlu0 %100, %v95
    %v102 = vpop.permute.xlu0 %101
    %105 = vset.pattern.permute.xlu0 0
    %106 = vperm.xlu0 %105, %v96
    %v107 = vpop.permute.xlu0 %106
    %110 = vset.pattern.permute.xlu0 0
    %111 = vperm.xlu0 %110, %v97
    %v112 = vpop.permute.xlu0 %111
    %115 = vset.pattern.permute.xlu0 0
    %116 = vperm.xlu0 %115, %v98
    %v117 = vpop.permute.xlu0 %116
    %vm119 = vcmask 261120
    %v121 = vsel %vm119, %v91, 0
    %v124 = vsel %vm119, %v92, 0
    %v127 = vsel %vm119, %v93, 0
    %v130 = vsel %vm119, %v94, 0
    %132 = vmatpush.msra.mxu0 0.0
    %133 = vmatpush.msra.mxu0 0.0
    %134 = vmatpush.msra.mxu0 0.0
    %135 = vmatpush.msra.mxu0 0.0
    %136 = vmatpush.msra.mxu0 0.0
    %137 = vmatpush.msra.mxu0 0.0
    %138 = vmatpush.msra.mxu0 0.0
    %139 = vmatpush.msra.mxu0 0.0
    %140 = vmatpush.msra.mxu0 0.0
    %141 = vmatpush.msra.mxu0 0.0
    %142 = vmatpush.msra.mxu0 0.0
    %143 = vmatpush.msra.mxu0 0.0
    %144 = vmatpush.msra.mxu0 %v90
    %145 = vmatpush.msra.mxu0 %v89
    %146 = vmatpush.msra.mxu0 %v88
    %147 = vmatpush.msra.mxu0 %v87
    %148 = vmatmul.f32.gmra.mxu0 %v121
    %v149 = vpop.f32.mrf.mxu0
    %v150 = vadd.f32 %v102, %v149
    %151 = vmatmul.f32.gmra.mxu0 %v124
    %v152 = vpop.f32.mrf.mxu0
    %v153 = vadd.f32 %v107, %v152
    %154 = vmatmul.f32.gmra.mxu0 %v127
    %v155 = vpop.f32.mrf.mxu0
    %v156 = vadd.f32 %v112, %v155
    %157 = vmatmul.f32.gmra.mxu0 %v130
    %v158 = vpop.f32.mrf.mxu0
    %v159 = vadd.f32 %v117, %v158
    %160 = vdwg.mxu0
    %v161 = vtanh.pop %v150
    %v162 = vtanh.pop %v153
    %v163 = vtanh.pop %v156
    %v164 = vtanh.pop %v159
    %v165 = vld [vmem:[%s5] sm:$0x7]
    %v166 = vld [vmem:[%s6] sm:$0x7]
    %168 = vset.pattern.permute.xlu0 0
    %169 = vperm.xlu0 %168, %v166
    %v170 = vpop.permute.xlu0 %169
    %v173 = vsel %vm119, %v165, 0
    %175 = vmatpush.msra.mxu0 0.0
    %176 = vmatpush.msra.mxu0 0.0
    %177 = vmatpush.msra.mxu0 0.0
    %178 = vmatpush.msra.mxu0 0.0
    %179 = vmatpush.msra.mxu0 0.0
    %180 = vmatpush.msra.mxu0 0.0
    %181 = vmatpush.msra.mxu0 0.0
    %182 = vmatpush.msra.mxu0 0.0
    %183 = vmatpush.msra.mxu0 0.0
    %184 = vmatpush.msra.mxu0 0.0
    %185 = vmatpush.msra.mxu0 0.0
    %186 = vmatpush.msra.mxu0 0.0
    %187 = vmatpush.msra.mxu0 %v164
    %188 = vmatpush.msra.mxu0 %v163
    %189 = vmatpush.msra.mxu0 %v162
    %190 = vmatpush.msra.mxu0 %v161
    %191 = vmatmul.f32.gmra.mxu0 %v173
    %v192 = vpop.f32.mrf.mxu0
    %v193 = vadd.f32 %v170, %v192
    %194 = vdwg.mxu0
    %195 = vst [vmem:[#allocation2] sm:$0x7] %v193
    // Predicated region
    $region30: #{tpu_custom_call.1} parent=1 // pred_check
      _
    $region31: #{tpu_custom_call.1} parent=1 // pred_check_branch
      %197 = sbr.rel (0) target = $region33
    $region32: #{tpu_custom_call.1} parent=1 // pred_region
      %199 = vsyncadd [#allocation3], 0
      %s201 = sshll.u32 [#allocation2], 4
      %s202 = int_to_ptr.vmem [resolvable:$true] %s201
      %s203 = sshll.u32 %s7, 4
      %s204 = int_to_ptr.hbm [resolvable:$true] %s203
      %206 = dma.vmem_to_hbm [thread:$0]  %s202, 64, %s204, [#allocation3]
    $region33: #{tpu_custom_call.1} parent=1 // pred_fallthru
      _
    // Predicated region
    $region34: #{tpu_custom_call.1} parent=1 // pred_check
      _
    $region35: #{tpu_custom_call.1} parent=1 // pred_check_branch
      %208 = sbr.rel (0) target = $region37
    $region36: #{tpu_custom_call.1} parent=1 // pred_region
      %210 = dma.done [#allocation3], 64
    $region37: #{tpu_custom_call.1} parent=1 // pred_fallthru
      _
    %211 = vsyncpa [#allocation3], 1

</llo_original>
